<compile_context>
chip_gen: v5e
topology: v5e:2x2
jax: 0.10.0
libtpu: 0.0.40
codegen_flags: <defaults>
</compile_context>

<pallas_src>
import jax
import jax.numpy as jnp
from jax.experimental import pallas as pl
from jax.experimental.pallas import tpu as pltpu

_NUM_LAYERS = 5
_PAD = 128          # lane-padded width used for every feature dimension
_SLOPE = 0.01       # PyTorch F.leaky_relu default negative_slope


def _round_up(x, m):
    return (x + m - 1) // m * m


def net5_kernel(x_ref, w_ref, b_ref, o_ref):
    """Fused 5-layer MLP on one (TB, 128) batch tile.

    x_ref: (TB, 128) bf16     -- batch tile, features zero-padded to 128
    w_ref: (5, 128, 128) bf16 -- packed, zero-padded weights (in, out) per layer
    b_ref: (8, 128) f32       -- rows 0..4 are the packed, zero-padded biases
    o_ref: (TB, 128) f32      -- lane-dense output; real result lives in column 0
    """
    h = x_ref[...]                                        # (TB, 128) bf16
    for i in range(_NUM_LAYERS):                          # unrolled: 5 MXU passes
        acc = jnp.dot(h, w_ref[i], preferred_element_type=jnp.float32)
        acc = acc + b_ref[i:i + 1, :]                     # (1,128) f32 broadcast
        acc = jnp.maximum(acc, _SLOPE * acc)              # leaky_relu, single vmax
        h = acc.astype(jnp.bfloat16) if i + 1 < _NUM_LAYERS else acc
    o_ref[...] = h                                        # f32, unmasked full-lane vst


def pack_params(params, n):
    """Pack w1..w5 / b1..b5 into two contiguous, (8,128)-friendly buffers (do once)."""
    dims = [(n, 100), (100, 50), (50, 50), (50, 50), (50, 1)]
    w_packed = jnp.zeros((_NUM_LAYERS, _PAD, _PAD), jnp.float32)
    b_packed = jnp.zeros((8, _PAD), jnp.float32)
    for i, (fi, fo) in enumerate(dims):
        w_packed = w_packed.at[i, :fi, :fo].set(params[f"w{i + 1}"])
        b_packed = b_packed.at[i, :fo].set(params[f"b{i + 1}"].reshape(-1))
    return w_packed.astype(jnp.bfloat16), b_packed        # bf16 weights, f32 biases


def net5_forward(x, packed, *, max_tile_b=256):
    """x: (B, n) float32 with n <= 128; packed: output of pack_params."""
    w_packed, b_packed = packed
    B, n = x.shape
    assert n <= _PAD, "input feature dim must be <= 128 for this packing"

    TB = min(max_tile_b, _round_up(B, 8))                 # batch tile (>=8 sublanes)
    Bp = _round_up(B, TB)
    x_pad = jnp.zeros((Bp, _PAD), jnp.bfloat16).at[:B, :n].set(x.astype(jnp.bfloat16))

    out = pl.pallas_call(
        net5_kernel,
        out_shape=jax.ShapeDtypeStruct((Bp, _PAD), jnp.float32),
        grid=(Bp // TB,),
        in_specs=[
            pl.BlockSpec((TB, _PAD), lambda i: (i, 0)),                    # x tile
            pl.BlockSpec((_NUM_LAYERS, _PAD, _PAD), lambda i: (0, 0, 0)),  # weights (resident)
            pl.BlockSpec((8, _PAD), lambda i: (0, 0)),                     # biases (resident)
        ],
        out_specs=pl.BlockSpec((TB, _PAD), lambda i: (i, 0)),
        compiler_params=pltpu.CompilerParams(
            dimension_semantics=("parallel",)),            # v7x: shard batch over 2 TCs
    )(x_pad, w_packed, b_packed)

    return out[:B, :1]                                     # column 0 holds the real output


def init_params(key, n):
    """Deterministic init mirroring nn.Linear's U(-1/sqrt(fan_in), 1/sqrt(fan_in))."""
    dims = [(n, 100), (100, 50), (50, 50), (50, 50), (50, 1)]
    params = {}
    for i, (fan_in, fan_out) in enumerate(dims, start=1):
        key, kw, kb = jax.random.split(key, 3)
        bound = 1.0 / jnp.sqrt(jnp.float32(fan_in))
        params[f"w{i}"] = jax.random.uniform(kw, (fan_in, fan_out), jnp.float32,
                                             minval=-bound, maxval=bound)
        params[f"b{i}"] = jax.random.uniform(kb, (1, fan_out), jnp.float32,
                                             minval=-bound, maxval=bound)
    return params


def reference_forward_f32(x, params):
    h = x
    for i in range(1, 6):
        h = h @ params[f"w{i}"] + params[f"b{i}"]
        h = jnp.where(h >= 0, h, _SLOPE * h)
    return h


def reference_forward_bf16(x, params):
    """Reference with the same bf16-operand / f32-accumulate scheme as the kernel."""
    h = x.astype(jnp.bfloat16)
    for i in range(1, 6):
        acc = jnp.dot(h, params[f"w{i}"].astype(jnp.bfloat16),
                      preferred_element_type=jnp.float32) + params[f"b{i}"]
        acc = jnp.maximum(acc, _SLOPE * acc)
        h = acc.astype(jnp.bfloat16) if i < 5 else acc
    return acc


if __name__ == "__main__":
    key = jax.random.PRNGKey(0)
    n = 32          # input feature dim
    key, kx1, kx2, kp = jax.random.split(key, 4)
    params = init_params(kp, n)
    packed = pack_params(params, n)   # pack once, reuse across calls

    # Test 1: small single-tile batch.
    batch = 8
    x = jax.random.normal(kx1, (batch, n), jnp.float32)
    out = net5_forward(x, packed)
    jax.block_until_ready(out)
    ref_bf16 = reference_forward_bf16(x, params)
    ref_f32 = reference_forward_f32(x, params)
    assert out.shape == (batch, 1)
    assert jnp.allclose(out, ref_bf16, atol=1e-2, rtol=1e-2), \
        f"mismatch vs bf16 reference: {jnp.max(jnp.abs(out - ref_bf16))}"
    assert jnp.allclose(out, ref_f32, atol=1e-1, rtol=1e-1), \
        f"mismatch vs f32 reference: {jnp.max(jnp.abs(out - ref_f32))}"

    # Test 2: ragged batch with a multi-step grid (exercises padding + batch tiling).
    batch2 = 37
    x2 = jax.random.normal(kx2, (batch2, n), jnp.float32)
    out2 = net5_forward(x2, packed, max_tile_b=16)
    jax.block_until_ready(out2)
    ref2 = reference_forward_bf16(x2, params)
    assert out2.shape == (batch2, 1)
    assert jnp.allclose(out2, ref2, atol=1e-2, rtol=1e-2), \
        f"mismatch vs bf16 reference (ragged batch): {jnp.max(jnp.abs(out2 - ref2))}"

    print("KERNEL_OK")
</pallas_src>

<mosaic_0001>
module attributes {stable_mosaic.version = 11 : i64} {
  func.func @net5_kernel(%arg0: i32, %arg1: memref<8x128xbf16, #tpu.memory_space<vmem>>, %arg2: memref<5x128x128xbf16, #tpu.memory_space<vmem>>, %arg3: memref<8x128xf32, #tpu.memory_space<vmem>>, %arg4: memref<8x128xf32, #tpu.memory_space<vmem>>) attributes {dimension_semantics = [#tpu.dimension_semantics<parallel>], iteration_bounds = array<i64: 1>, scalar_prefetch = 0 : i64, scratch_operands = 0 : i64, tpu.core_type = #tpu.core_type<tc>, window_params = [{transform_indices = @transform_0, window_bounds = array<i64: 8, 128>}, {pipeline_mode = #tpu.pipeline_mode<synchronous>, transform_indices = @transform_1, window_bounds = array<i64: 5, 128, 128>}, {pipeline_mode = #tpu.pipeline_mode<synchronous>, transform_indices = @transform_2, window_bounds = array<i64: 8, 128>}, {transform_indices = @transform_3, window_bounds = array<i64: 8, 128>}]} {
    %c0 = arith.constant 0 : index
    %c0_0 = arith.constant 0 : index
    %0 = vector.load %arg1[%c0, %c0_0] : memref<8x128xbf16, #tpu.memory_space<vmem>>, vector<8x128xbf16>
    %c0_1 = arith.constant 0 : index
    %c0_2 = arith.constant 0 : index
    %c0_3 = arith.constant 0 : index
    %1 = vector.load %arg2[%c0_1, %c0_2, %c0_3] : memref<5x128x128xbf16, #tpu.memory_space<vmem>>, vector<1x128x128xbf16>
    %2 = vector.shape_cast %1 : vector<1x128x128xbf16> to vector<128x128xbf16>
    %cst = arith.constant dense<0.000000e+00> : vector<8x128xf32>
    %3 = tpu.matmul %0, %2, %cst {dimension_numbers = #tpu.dot_dimension_numbers<[1], [0], [0], [1], [0, 0, 1, 1], [], []>} : vector<8x128xbf16>, vector<128x128xbf16>, vector<8x128xf32> -> vector<8x128xf32>
    %c0_4 = arith.constant 0 : index
    %c0_5 = arith.constant 0 : index
    %4 = vector.load %arg3[%c0_4, %c0_5] : memref<8x128xf32, #tpu.memory_space<vmem>>, vector<1x128xf32>
    %5 = vector.broadcast %4 : vector<1x128xf32> to vector<8x128xf32>
    %6 = arith.addf %3, %5 : vector<8x128xf32>
    %cst_6 = arith.constant 0.00999999977 : f32
    %7 = vector.broadcast %cst_6 : f32 to vector<8x128xf32>
    %8 = arith.mulf %7, %6 : vector<8x128xf32>
    %9 = arith.maximumf %6, %8 : vector<8x128xf32>
    %10 = arith.truncf %9 : vector<8x128xf32> to vector<8x128xbf16>
    %c1 = arith.constant 1 : index
    %c0_7 = arith.constant 0 : index
    %c0_8 = arith.constant 0 : index
    %11 = vector.load %arg2[%c1, %c0_7, %c0_8] : memref<5x128x128xbf16, #tpu.memory_space<vmem>>, vector<1x128x128xbf16>
    %12 = vector.shape_cast %11 : vector<1x128x128xbf16> to vector<128x128xbf16>
    %cst_9 = arith.constant dense<0.000000e+00> : vector<8x128xf32>
    %13 = tpu.matmul %10, %12, %cst_9 {dimension_numbers = #tpu.dot_dimension_numbers<[1], [0], [0], [1], [0, 0, 1, 1], [], []>} : vector<8x128xbf16>, vector<128x128xbf16>, vector<8x128xf32> -> vector<8x128xf32>
    %c1_10 = arith.constant 1 : index
    %c0_11 = arith.constant 0 : index
    %14 = vector.load %arg3[%c1_10, %c0_11] : memref<8x128xf32, #tpu.memory_space<vmem>>, vector<1x128xf32>
    %15 = vector.broadcast %14 : vector<1x128xf32> to vector<8x128xf32>
    %16 = arith.addf %13, %15 : vector<8x128xf32>
    %cst_12 = arith.constant 0.00999999977 : f32
    %17 = vector.broadcast %cst_12 : f32 to vector<8x128xf32>
    %18 = arith.mulf %17, %16 : vector<8x128xf32>
    %19 = arith.maximumf %16, %18 : vector<8x128xf32>
    %20 = arith.truncf %19 : vector<8x128xf32> to vector<8x128xbf16>
    %c2 = arith.constant 2 : index
    %c0_13 = arith.constant 0 : index
    %c0_14 = arith.constant 0 : index
    %21 = vector.load %arg2[%c2, %c0_13, %c0_14] : memref<5x128x128xbf16, #tpu.memory_space<vmem>>, vector<1x128x128xbf16>
    %22 = vector.shape_cast %21 : vector<1x128x128xbf16> to vector<128x128xbf16>
    %cst_15 = arith.constant dense<0.000000e+00> : vector<8x128xf32>
    %23 = tpu.matmul %20, %22, %cst_15 {dimension_numbers = #tpu.dot_dimension_numbers<[1], [0], [0], [1], [0, 0, 1, 1], [], []>} : vector<8x128xbf16>, vector<128x128xbf16>, vector<8x128xf32> -> vector<8x128xf32>
    %c2_16 = arith.constant 2 : index
    %c0_17 = arith.constant 0 : index
    %24 = vector.load %arg3[%c2_16, %c0_17] : memref<8x128xf32, #tpu.memory_space<vmem>>, vector<1x128xf32>
    %25 = vector.broadcast %24 : vector<1x128xf32> to vector<8x128xf32>
    %26 = arith.addf %23, %25 : vector<8x128xf32>
    %cst_18 = arith.constant 0.00999999977 : f32
    %27 = vector.broadcast %cst_18 : f32 to vector<8x128xf32>
    %28 = arith.mulf %27, %26 : vector<8x128xf32>
    %29 = arith.maximumf %26, %28 : vector<8x128xf32>
    %30 = arith.truncf %29 : vector<8x128xf32> to vector<8x128xbf16>
    %c3 = arith.constant 3 : index
    %c0_19 = arith.constant 0 : index
    %c0_20 = arith.constant 0 : index
    %31 = vector.load %arg2[%c3, %c0_19, %c0_20] : memref<5x128x128xbf16, #tpu.memory_space<vmem>>, vector<1x128x128xbf16>
    %32 = vector.shape_cast %31 : vector<1x128x128xbf16> to vector<128x128xbf16>
    %cst_21 = arith.constant dense<0.000000e+00> : vector<8x128xf32>
    %33 = tpu.matmul %30, %32, %cst_21 {dimension_numbers = #tpu.dot_dimension_numbers<[1], [0], [0], [1], [0, 0, 1, 1], [], []>} : vector<8x128xbf16>, vector<128x128xbf16>, vector<8x128xf32> -> vector<8x128xf32>
    %c3_22 = arith.constant 3 : index
    %c0_23 = arith.constant 0 : index
    %34 = vector.load %arg3[%c3_22, %c0_23] : memref<8x128xf32, #tpu.memory_space<vmem>>, vector<1x128xf32>
    %35 = vector.broadcast %34 : vector<1x128xf32> to vector<8x128xf32>
    %36 = arith.addf %33, %35 : vector<8x128xf32>
    %cst_24 = arith.constant 0.00999999977 : f32
    %37 = vector.broadcast %cst_24 : f32 to vector<8x128xf32>
    %38 = arith.mulf %37, %36 : vector<8x128xf32>
    %39 = arith.maximumf %36, %38 : vector<8x128xf32>
    %40 = arith.truncf %39 : vector<8x128xf32> to vector<8x128xbf16>
    %c4 = arith.constant 4 : index
    %c0_25 = arith.constant 0 : index
    %c0_26 = arith.constant 0 : index
    %41 = vector.load %arg2[%c4, %c0_25, %c0_26] : memref<5x128x128xbf16, #tpu.memory_space<vmem>>, vector<1x128x128xbf16>
    %42 = vector.shape_cast %41 : vector<1x128x128xbf16> to vector<128x128xbf16>
    %cst_27 = arith.constant dense<0.000000e+00> : vector<8x128xf32>
    %43 = tpu.matmul %40, %42, %cst_27 {dimension_numbers = #tpu.dot_dimension_numbers<[1], [0], [0], [1], [0, 0, 1, 1], [], []>} : vector<8x128xbf16>, vector<128x128xbf16>, vector<8x128xf32> -> vector<8x128xf32>
    %c4_28 = arith.constant 4 : index
    %c0_29 = arith.constant 0 : index
    %44 = vector.load %arg3[%c4_28, %c0_29] : memref<8x128xf32, #tpu.memory_space<vmem>>, vector<1x128xf32>
    %45 = vector.broadcast %44 : vector<1x128xf32> to vector<8x128xf32>
    %46 = arith.addf %43, %45 : vector<8x128xf32>
    %cst_30 = arith.constant 0.00999999977 : f32
    %47 = vector.broadcast %cst_30 : f32 to vector<8x128xf32>
    %48 = arith.mulf %47, %46 : vector<8x128xf32>
    %49 = arith.maximumf %46, %48 : vector<8x128xf32>
    %c0_31 = arith.constant 0 : index
    %c0_32 = arith.constant 0 : index
    %50 = vector.load %arg4[%c0_31, %c0_32] : memref<8x128xf32, #tpu.memory_space<vmem>>, vector<8x128xf32>
    tpu.vector_store %arg4[%c0_31, %c0_32], %49 {strides = array<i32>} : memref<8x128xf32, #tpu.memory_space<vmem>>, vector<8x128xf32>,
    return
  }
  func.func @transform_0(%arg0: i32) -> (i32, i32) {
    %c0_i32 = arith.constant 0 : i32
    %c0_i32_0 = arith.constant 0 : i32
    return %arg0, %c0_i32 : i32, i32
  }
  func.func @transform_1(%arg0: i32) -> (i32, i32, i32) {
    %c0_i32 = arith.constant 0 : i32
    %c0_i32_0 = arith.constant 0 : i32
    %c0_i32_1 = arith.constant 0 : i32
    %c0_i32_2 = arith.constant 0 : i32
    return %c0_i32, %c0_i32_0, %c0_i32_1 : i32, i32, i32
  }
  func.func @transform_2(%arg0: i32) -> (i32, i32) {
    %c0_i32 = arith.constant 0 : i32
    %c0_i32_0 = arith.constant 0 : i32
    %c0_i32_1 = arith.constant 0 : i32
    return %c0_i32, %c0_i32_0 : i32, i32
  }
  func.func @transform_3(%arg0: i32) -> (i32, i32) {
    %c0_i32 = arith.constant 0 : i32
    %c0_i32_0 = arith.constant 0 : i32
    return %arg0, %c0_i32 : i32, i32
  }
}

</mosaic_0001>

<llo_original>
// kernel: tpu_custom_call.1
$region0: #{tpu_custom_call.1}
  #allocation0 [shape = 'u32[]', space=smem, size = 0x4, offset = 0x4, fixed_abs, tag = 'smem constant byte address 0x4 - core index']
  #allocation1 [shape = 'u32[72,128]{1,0:T(1,128)}', space=vmem, size = 0x9000, scoped, tag = 'internal scratch']
  %s0 = inlined_call_operand.hbm [shape: bf16[8,128], index: 0, kind: input, shape index: {}]
  %s1 = inlined_call_operand.hbm [shape: bf16[5,128,128], index: 1, kind: input, shape index: {}]
  %s2 = inlined_call_operand.hbm [shape: f32[8,128], index: 2, kind: input, shape index: {}]
  %s3 = inlined_call_operand.hbm [shape: f32[8,128], index: 3, kind: output, shape index: {}]
  %s4 = sld [smem:[#allocation0]]
  $region34: #{tpu_custom_call.1} parent=0
    _
  %s6 = ssub.s32 1, %s4
  %s7 = scalar_select 0, %s6, %s4
  $region1: #{tpu_custom_call.1} parent=0
    #allocation2 [shape = 'u8[2048]{0}', space=vmem, size = 0x800, scoped, tag = 'input window, operand 0, single buffered']
    #allocation3 [shape = 's32[1]{0}', space=sflag, size = 0x4, scoped, tag = 'scoped memory for tpu_custom_call.1']
    #allocation4 [shape = 's32[1]{0}', space=sflag, size = 0x4, scoped, tag = 'scoped memory for tpu_custom_call.1']
    #allocation5 [shape = 'u8[163840]{0}', space=vmem, size = 0x28000, scoped, tag = 'input window, operand 1, single buffered']
    #allocation6 [shape = 's32[1]{0}', space=sflag, size = 0x4, scoped, tag = 'scoped memory for tpu_custom_call.1']
    #allocation7 [shape = 'u8[4096]{0}', space=vmem, size = 0x1000, scoped, tag = 'input window, operand 2, single buffered']
    #allocation8 [shape = 'u8[4096]{0}', space=vmem, size = 0x1000, scoped, tag = 'output window, operand 0, single buffered']
    %8 = vsyncpa [#allocation3], 0
    %9 = vsyncpa [#allocation6], 0
    %10 = vsyncpa [#allocation4], 0
    // Predicated region
    $region2: #{tpu_custom_call.1} parent=1 // pred_check
      _
    $region3: #{tpu_custom_call.1} parent=1 // pred_check_branch
      %12 = sbr.rel (0) target = $region5
    $region4: #{tpu_custom_call.1} parent=1 // pred_region
      %14 = vsyncadd [#allocation3], 0
      %s16 = sshll.u32 %s0, 4
      %s17 = int_to_ptr.hbm [resolvable:$true] %s16
      %s18 = sshll.u32 [#allocation2], 4
      %s19 = int_to_ptr.vmem [resolvable:$true] %s18
      %21 = dma.hbm_to_vmem [thread:$0]  %s17, 64, %s19, [#allocation3]
    $region5: #{tpu_custom_call.1} parent=1 // pred_fallthru
      _
    // Predicated region
    $region6: #{tpu_custom_call.1} parent=1 // pred_check
      _
    $region7: #{tpu_custom_call.1} parent=1 // pred_check_branch
      %23 = sbr.rel (0) target = $region9
    $region8: #{tpu_custom_call.1} parent=1 // pred_region
      %25 = vsyncadd [#allocation6], 0
      %s26 = sshll.u32 %s1, 4
      %s27 = int_to_ptr.hbm [resolvable:$true] %s26
      %s28 = sshll.u32 [#allocation5], 4
      %s29 = int_to_ptr.vmem [resolvable:$true] %s28
      %34 = dma.hbm_to_vmem [thread:$0]  %s27, 5120, %s29, [#allocation6], 64, 64, 4
    $region9: #{tpu_custom_call.1} parent=1 // pred_fallthru
      _
    // Predicated region
    $region10: #{tpu_custom_call.1} parent=1 // pred_check
      _
    $region11: #{tpu_custom_call.1} parent=1 // pred_check_branch
      %36 = sbr.rel (0) target = $region13
    $region12: #{tpu_custom_call.1} parent=1 // pred_region
      %38 = vsyncadd [#allocation6], 0
      %s40 = sshll.u32 %s2, 4
      %s41 = int_to_ptr.hbm [resolvable:$true] %s40
      %s42 = sshll.u32 [#allocation7], 4
      %s43 = int_to_ptr.vmem [resolvable:$true] %s42
      %45 = dma.hbm_to_vmem [thread:$0]  %s41, 128, %s43, [#allocation6]
    $region13: #{tpu_custom_call.1} parent=1 // pred_fallthru
      _
    // Predicated region
    $region14: #{tpu_custom_call.1} parent=1 // pred_check
      _
    $region15: #{tpu_custom_call.1} parent=1 // pred_check_branch
      %47 = sbr.rel (0) target = $region17
    $region16: #{tpu_custom_call.1} parent=1 // pred_region
      %49 = dma.done [#allocation3], 64
    $region17: #{tpu_custom_call.1} parent=1 // pred_fallthru
      _
    // Predicated region
    $region18: #{tpu_custom_call.1} parent=1 // pred_check
      _
    $region19: #{tpu_custom_call.1} parent=1 // pred_check_branch
      %51 = sbr.rel (0) target = $region21
    $region20: #{tpu_custom_call.1} parent=1 // pred_region
      %53 = dma.done [#allocation6], 5120
    $region21: #{tpu_custom_call.1} parent=1 // pred_fallthru
      _
    // Predicated region
    $region22: #{tpu_custom_call.1} parent=1 // pred_check
      _
    $region23: #{tpu_custom_call.1} parent=1 // pred_check_branch
      %55 = sbr.rel (0) target = $region25
    $region24: #{tpu_custom_call.1} parent=1 // pred_region
      %57 = dma.done [#allocation6], 128
    $region25: #{tpu_custom_call.1} parent=1 // pred_fallthru
      _
    %v58 = vld [vmem:[#allocation2] sm:$0xf]
    %v59 = vld [vmem:[#allocation5] sm:$0xf]
    %v60 = vld [vmem:[#allocation5 + $0x4] sm:$0xf]
    %v61 = vld [vmem:[#allocation5 + $0x8] sm:$0xf]
    %v62 = vld [vmem:[#allocation5 + $0xc] sm:$0xf]
    %v63 = vld [vmem:[#allocation5 + $0x10] sm:$0xf]
    %v64 = vld [vmem:[#allocation5 + $0x14] sm:$0xf]
    %v65 = vld [vmem:[#allocation5 + $0x18] sm:$0xf]
    %v66 = vld [vmem:[#allocation5 + $0x1c] sm:$0xf]
    %v67 = vld [vmem:[#allocation5 + $0x20] sm:$0xf]
    %v68 = vld [vmem:[#allocation5 + $0x24] sm:$0xf]
    %v69 = vld [vmem:[#allocation5 + $0x28] sm:$0xf]
    %v70 = vld [vmem:[#allocation5 + $0x2c] sm:$0xf]
    %v71 = vld [vmem:[#allocation5 + $0x30] sm:$0xf]
    %v72 = vld [vmem:[#allocation5 + $0x34] sm:$0xf]
    %v73 = vld [vmem:[#allocation5 + $0x38] sm:$0xf]
    %v74 = vld [vmem:[#allocation5 + $0x3c] sm:$0xf]
    %v75 = vld [vmem:[#allocation7] sm:$0x1]
    %v76 = vperm.slane %v75, 0
    %v93 = vunpack.c.l.b16 %v59
    %v94 = vunpack.c.l.b16 %v60
    %v95 = vunpack.c.l.b16 %v61
    %v96 = vunpack.c.l.b16 %v62
    %v97 = vunpack.c.l.b16 %v63
    %v98 = vunpack.c.l.b16 %v64
    %v99 = vunpack.c.l.b16 %v65
    %v100 = vunpack.c.l.b16 %v66
    %v101 = vunpack.c.l.b16 %v67
    %v102 = vunpack.c.l.b16 %v68
    %v103 = vunpack.c.l.b16 %v69
    %v104 = vunpack.c.l.b16 %v70
    %v105 = vunpack.c.l.b16 %v71
    %v106 = vunpack.c.l.b16 %v72
    %v107 = vunpack.c.l.b16 %v73
    %v108 = vunpack.c.l.b16 %v74
    %v109 = vpack.c.b16 %v94, %v93
    %v110 = vpack.c.b16 %v96, %v95
    %v111 = vpack.c.b16 %v98, %v97
    %v112 = vpack.c.b16 %v100, %v99
    %v113 = vpack.c.b16 %v102, %v101
    %v114 = vpack.c.b16 %v104, %v103
    %v115 = vpack.c.b16 %v106, %v105
    %v116 = vpack.c.b16 %v108, %v107
    %125 = vmatpush.bf16.msra.mxu0 %v116
    %126 = vmatpush.bf16.msra.mxu0 %v115
    %127 = vmatpush.bf16.msra.mxu0 %v114
    %128 = vmatpush.bf16.msra.mxu0 %v113
    %129 = vmatpush.bf16.msra.mxu0 %v112
    %130 = vmatpush.bf16.msra.mxu0 %v111
    %131 = vmatpush.bf16.msra.mxu0 %v110
    %132 = vmatpush.bf16.msra.mxu0 %v109
    %133 = vmatmul.bf16.gmra.mxu0 %v58
    %v134 = vpop.f32.mrf.mxu0
    %v135 = vadd.f32 %v76, %v134
    %v136 = vpop.f32.mrf.mxu0
    %137 = vdwg.mxu0
    %v138 = vmul.f32 %v135, 0.01
    %v139 = vmax.f32 %v135, %v138
    %v140 = vpack.c.bf16 %v139, %v139
    %s141 = scalar_lea.vmem [#allocation5], 64
    %v142 = vld [vmem:[%s141] sm:$0xf]
    %v143 = vld [vmem:[%s141 + $0x4] sm:$0xf]
    %v144 = vld [vmem:[%s141 + $0x8] sm:$0xf]
    %v145 = vld [vmem:[%s141 + $0xc] sm:$0xf]
    %v146 = vld [vmem:[%s141 + $0x10] sm:$0xf]
    %v147 = vld [vmem:[%s141 + $0x14] sm:$0xf]
    %v148 = vld [vmem:[%s141 + $0x18] sm:$0xf]
    %v149 = vld [vmem:[%s141 + $0x1c] sm:$0xf]
    %v150 = vld [vmem:[%s141 + $0x20] sm:$0xf]
    %v151 = vld [vmem:[%s141 + $0x24] sm:$0xf]
    %v152 = vld [vmem:[%s141 + $0x28] sm:$0xf]
    %v153 = vld [vmem:[%s141 + $0x2c] sm:$0xf]
    %v154 = vld [vmem:[%s141 + $0x30] sm:$0xf]
    %v155 = vld [vmem:[%s141 + $0x34] sm:$0xf]
    %v156 = vld [vmem:[%s141 + $0x38] sm:$0xf]
    %v157 = vld [vmem:[%s141 + $0x3c] sm:$0xf]
    %v158 = vld [vmem:[#allocation7 + $0x1] sm:$0x1]
    %v159 = vperm.slane %v158, 0
    %v176 = vunpack.c.l.b16 %v142
    %v177 = vunpack.c.l.b16 %v143
    %v178 = vunpack.c.l.b16 %v144
    %v179 = vunpack.c.l.b16 %v145
    %v180 = vunpack.c.l.b16 %v146
    %v181 = vunpack.c.l.b16 %v147
    %v182 = vunpack.c.l.b16 %v148
    %v183 = vunpack.c.l.b16 %v149
    %v184 = vunpack.c.l.b16 %v150
    %v185 = vunpack.c.l.b16 %v151
    %v186 = vunpack.c.l.b16 %v152
    %v187 = vunpack.c.l.b16 %v153
    %v188 = vunpack.c.l.b16 %v154
    %v189 = vunpack.c.l.b16 %v155
    %v190 = vunpack.c.l.b16 %v156
    %v191 = vunpack.c.l.b16 %v157
    %v192 = vpack.c.b16 %v177, %v176
    %v193 = vpack.c.b16 %v179, %v178
    %v194 = vpack.c.b16 %v181, %v180
    %v195 = vpack.c.b16 %v183, %v182
    %v196 = vpack.c.b16 %v185, %v184
    %v197 = vpack.c.b16 %v187, %v186
    %v198 = vpack.c.b16 %v189, %v188
    %v199 = vpack.c.b16 %v191, %v190
    %208 = vmatpush.bf16.msra.mxu0 %v199
    %209 = vmatpush.bf16.msra.mxu0 %v198
    %210 = vmatpush.bf16.msra.mxu0 %v197
    %211 = vmatpush.bf16.msra.mxu0 %v196
    %212 = vmatpush.bf16.msra.mxu0 %v195
    %213 = vmatpush.bf16.msra.mxu0 %v194
    %214 = vmatpush.bf16.msra.mxu0 %v193
    %215 = vmatpush.bf16.msra.mxu0 %v192
    %216 = vmatmul.bf16.gmra.mxu0 %v140
    %v217 = vpop.f32.mrf.mxu0
    %v218 = vadd.f32 %v159, %v217
    %v219 = vpop.f32.mrf.mxu0
    %220 = vdwg.mxu0
    %v221 = vmul.f32 %v218, 0.01
    %v222 = vmax.f32 %v218, %v221
    %v223 = vpack.c.bf16 %v222, %v222
    %s224 = scalar_lea.vmem [#allocation5], 128
    %v225 = vld [vmem:[%s224] sm:$0xf]
    %v226 = vld [vmem:[%s224 + $0x4] sm:$0xf]
    %v227 = vld [vmem:[%s224 + $0x8] sm:$0xf]
    %v228 = vld [vmem:[%s224 + $0xc] sm:$0xf]
    %v229 = vld [vmem:[%s224 + $0x10] sm:$0xf]
    %v230 = vld [vmem:[%s224 + $0x14] sm:$0xf]
    %v231 = vld [vmem:[%s224 + $0x18] sm:$0xf]
    %v232 = vld [vmem:[%s224 + $0x1c] sm:$0xf]
    %v233 = vld [vmem:[%s224 + $0x20] sm:$0xf]
    %v234 = vld [vmem:[%s224 + $0x24] sm:$0xf]
    %v235 = vld [vmem:[%s224 + $0x28] sm:$0xf]
    %v236 = vld [vmem:[%s224 + $0x2c] sm:$0xf]
    %v237 = vld [vmem:[%s224 + $0x30] sm:$0xf]
    %v238 = vld [vmem:[%s224 + $0x34] sm:$0xf]
    %v239 = vld [vmem:[%s224 + $0x38] sm:$0xf]
    %v240 = vld [vmem:[%s224 + $0x3c] sm:$0xf]
    %v241 = vld [vmem:[#allocation7 + $0x2] sm:$0x1]
    %v242 = vperm.slane %v241, 0
    %v259 = vunpack.c.l.b16 %v225
    %v260 = vunpack.c.l.b16 %v226
    %v261 = vunpack.c.l.b16 %v227
    %v262 = vunpack.c.l.b16 %v228
    %v263 = vunpack.c.l.b16 %v229
    %v264 = vunpack.c.l.b16 %v230
    %v265 = vunpack.c.l.b16 %v231
    %v266 = vunpack.c.l.b16 %v232
    %v267 = vunpack.c.l.b16 %v233
    %v268 = vunpack.c.l.b16 %v234
    %v269 = vunpack.c.l.b16 %v235
    %v270 = vunpack.c.l.b16 %v236
    %v271 = vunpack.c.l.b16 %v237
    %v272 = vunpack.c.l.b16 %v238
    %v273 = vunpack.c.l.b16 %v239
    %v274 = vunpack.c.l.b16 %v240
    %v275 = vpack.c.b16 %v260, %v259
    %v276 = vpack.c.b16 %v262, %v261
    %v277 = vpack.c.b16 %v264, %v263
    %v278 = vpack.c.b16 %v266, %v265
    %v279 = vpack.c.b16 %v268, %v267
    %v280 = vpack.c.b16 %v270, %v269
    %v281 = vpack.c.b16 %v272, %v271
    %v282 = vpack.c.b16 %v274, %v273
    %291 = vmatpush.bf16.msra.mxu0 %v282
    %292 = vmatpush.bf16.msra.mxu0 %v281
    %293 = vmatpush.bf16.msra.mxu0 %v280
    %294 = vmatpush.bf16.msra.mxu0 %v279
    %295 = vmatpush.bf16.msra.mxu0 %v278
    %296 = vmatpush.bf16.msra.mxu0 %v277
    %297 = vmatpush.bf16.msra.mxu0 %v276
    %298 = vmatpush.bf16.msra.mxu0 %v275
    %299 = vmatmul.bf16.gmra.mxu0 %v223
    %v300 = vpop.f32.mrf.mxu0
    %v301 = vadd.f32 %v242, %v300
    %v302 = vpop.f32.mrf.mxu0
    %303 = vdwg.mxu0
    %v304 = vmul.f32 %v301, 0.01
    %v305 = vmax.f32 %v301, %v304
    %v306 = vpack.c.bf16 %v305, %v305
    %s307 = scalar_lea.vmem [#allocation5], 192
    %v308 = vld [vmem:[%s307] sm:$0xf]
    %v309 = vld [vmem:[%s307 + $0x4] sm:$0xf]
    %v310 = vld [vmem:[%s307 + $0x8] sm:$0xf]
    %v311 = vld [vmem:[%s307 + $0xc] sm:$0xf]
    %v312 = vld [vmem:[%s307 + $0x10] sm:$0xf]
    %v313 = vld [vmem:[%s307 + $0x14] sm:$0xf]
    %v314 = vld [vmem:[%s307 + $0x18] sm:$0xf]
    %v315 = vld [vmem:[%s307 + $0x1c] sm:$0xf]
    %v316 = vld [vmem:[%s307 + $0x20] sm:$0xf]
    %v317 = vld [vmem:[%s307 + $0x24] sm:$0xf]
    %v318 = vld [vmem:[%s307 + $0x28] sm:$0xf]
    %v319 = vld [vmem:[%s307 + $0x2c] sm:$0xf]
    %v320 = vld [vmem:[%s307 + $0x30] sm:$0xf]
    %v321 = vld [vmem:[%s307 + $0x34] sm:$0xf]
    %v322 = vld [vmem:[%s307 + $0x38] sm:$0xf]
    %v323 = vld [vmem:[%s307 + $0x3c] sm:$0xf]
    %v324 = vld [vmem:[#allocation7 + $0x3] sm:$0x1]
    %v325 = vperm.slane %v324, 0
    %v342 = vunpack.c.l.b16 %v308
    %v343 = vunpack.c.l.b16 %v309
    %v344 = vunpack.c.l.b16 %v310
    %v345 = vunpack.c.l.b16 %v311
    %v346 = vunpack.c.l.b16 %v312
    %v347 = vunpack.c.l.b16 %v313
    %v348 = vunpack.c.l.b16 %v314
    %v349 = vunpack.c.l.b16 %v315
    %v350 = vunpack.c.l.b16 %v316
    %v351 = vunpack.c.l.b16 %v317
    %v352 = vunpack.c.l.b16 %v318
    %v353 = vunpack.c.l.b16 %v319
    %v354 = vunpack.c.l.b16 %v320
    %v355 = vunpack.c.l.b16 %v321
    %v356 = vunpack.c.l.b16 %v322
    %v357 = vunpack.c.l.b16 %v323
    %v358 = vpack.c.b16 %v343, %v342
    %v359 = vpack.c.b16 %v345, %v344
    %v360 = vpack.c.b16 %v347, %v346
    %v361 = vpack.c.b16 %v349, %v348
    %v362 = vpack.c.b16 %v351, %v350
    %v363 = vpack.c.b16 %v353, %v352
    %v364 = vpack.c.b16 %v355, %v354
    %v365 = vpack.c.b16 %v357, %v356
    %374 = vmatpush.bf16.msra.mxu0 %v365
    %375 = vmatpush.bf16.msra.mxu0 %v364
    %376 = vmatpush.bf16.msra.mxu0 %v363
    %377 = vmatpush.bf16.msra.mxu0 %v362
    %378 = vmatpush.bf16.msra.mxu0 %v361
    %379 = vmatpush.bf16.msra.mxu0 %v360
    %380 = vmatpush.bf16.msra.mxu0 %v359
    %381 = vmatpush.bf16.msra.mxu0 %v358
    %382 = vmatmul.bf16.gmra.mxu0 %v306
    %v383 = vpop.f32.mrf.mxu0
    %v384 = vadd.f32 %v325, %v383
    %v385 = vpop.f32.mrf.mxu0
    %386 = vdwg.mxu0
    %v387 = vmul.f32 %v384, 0.01
    %v388 = vmax.f32 %v384, %v387
    %v389 = vpack.c.bf16 %v388, %v388
    %s390 = scalar_lea.vmem [#allocation5], 256
    %v391 = vld [vmem:[%s390] sm:$0xf]
    %v392 = vld [vmem:[%s390 + $0x4] sm:$0xf]
    %v393 = vld [vmem:[%s390 + $0x8] sm:$0xf]
    %v394 = vld [vmem:[%s390 + $0xc] sm:$0xf]
    %v395 = vld [vmem:[%s390 + $0x10] sm:$0xf]
    %v396 = vld [vmem:[%s390 + $0x14] sm:$0xf]
    %v397 = vld [vmem:[%s390 + $0x18] sm:$0xf]
    %v398 = vld [vmem:[%s390 + $0x1c] sm:$0xf]
    %v399 = vld [vmem:[%s390 + $0x20] sm:$0xf]
    %v400 = vld [vmem:[%s390 + $0x24] sm:$0xf]
    %v401 = vld [vmem:[%s390 + $0x28] sm:$0xf]
    %v402 = vld [vmem:[%s390 + $0x2c] sm:$0xf]
    %v403 = vld [vmem:[%s390 + $0x30] sm:$0xf]
    %v404 = vld [vmem:[%s390 + $0x34] sm:$0xf]
    %v405 = vld [vmem:[%s390 + $0x38] sm:$0xf]
    %v406 = vld [vmem:[%s390 + $0x3c] sm:$0xf]
    %v407 = vld [vmem:[#allocation7 + $0x4] sm:$0x1]
    %v408 = vperm.slane %v407, 0
    %v425 = vunpack.c.l.b16 %v391
    %v426 = vunpack.c.l.b16 %v392
    %v427 = vunpack.c.l.b16 %v393
    %v428 = vunpack.c.l.b16 %v394
    %v429 = vunpack.c.l.b16 %v395
    %v430 = vunpack.c.l.b16 %v396
    %v431 = vunpack.c.l.b16 %v397
    %v432 = vunpack.c.l.b16 %v398
    %v433 = vunpack.c.l.b16 %v399
    %v434 = vunpack.c.l.b16 %v400
    %v435 = vunpack.c.l.b16 %v401
    %v436 = vunpack.c.l.b16 %v402
    %v437 = vunpack.c.l.b16 %v403
    %v438 = vunpack.c.l.b16 %v404
    %v439 = vunpack.c.l.b16 %v405
    %v440 = vunpack.c.l.b16 %v406
    %v441 = vpack.c.b16 %v426, %v425
    %v442 = vpack.c.b16 %v428, %v427
    %v443 = vpack.c.b16 %v430, %v429
    %v444 = vpack.c.b16 %v432, %v431
    %v445 = vpack.c.b16 %v434, %v433
    %v446 = vpack.c.b16 %v436, %v435
    %v447 = vpack.c.b16 %v438, %v437
    %v448 = vpack.c.b16 %v440, %v439
    %457 = vmatpush.bf16.msra.mxu0 %v448
    %458 = vmatpush.bf16.msra.mxu0 %v447
    %459 = vmatpush.bf16.msra.mxu0 %v446
    %460 = vmatpush.bf16.msra.mxu0 %v445
    %461 = vmatpush.bf16.msra.mxu0 %v444
    %462 = vmatpush.bf16.msra.mxu0 %v443
    %463 = vmatpush.bf16.msra.mxu0 %v442
    %464 = vmatpush.bf16.msra.mxu0 %v441
    %465 = vmatmul.bf16.gmra.mxu0 %v389
    %v466 = vpop.f32.mrf.mxu0
    %v467 = vadd.f32 %v408, %v466
    %v468 = vpop.f32.mrf.mxu0
    %469 = vdwg.mxu0
    %v470 = vmul.f32 %v467, 0.01
    %v471 = vmax.f32 %v467, %v470
    %472 = vst [vmem:[#allocation8] sm:$0xff] %v471
    // Predicated region
    $region26: #{tpu_custom_call.1} parent=1 // pred_check
      _
    $region27: #{tpu_custom_call.1} parent=1 // pred_check_branch
      %474 = sbr.rel (0) target = $region29
    $region28: #{tpu_custom_call.1} parent=1 // pred_region
      %476 = vsyncadd [#allocation4], 0
      %s478 = sshll.u32 [#allocation8], 4
      %s479 = int_to_ptr.vmem [resolvable:$true] %s478
      %s480 = sshll.u32 %s3, 4
      %s481 = int_to_ptr.hbm [resolvable:$true] %s480
      %483 = dma.vmem_to_hbm [thread:$0]  %s479, 128, %s481, [#allocation4]
    $region29: #{tpu_custom_call.1} parent=1 // pred_fallthru
      _
    // Predicated region
    $region30: #{tpu_custom_call.1} parent=1 // pred_check
      _
    $region31: #{tpu_custom_call.1} parent=1 // pred_check_branch
      %485 = sbr.rel (0) target = $region33
    $region32: #{tpu_custom_call.1} parent=1 // pred_region
      %487 = dma.done [#allocation4], 128
    $region33: #{tpu_custom_call.1} parent=1 // pred_fallthru
      _
    %488 = vsyncpa [#allocation3], 1
    %489 = vsyncpa [#allocation6], 1
    %490 = vsyncpa [#allocation4], 1

</llo_original>
